<compile_context>
chip_gen: v5e
topology: v5e:2x2
jax: 0.10.0
libtpu: 0.0.40
codegen_flags: <defaults>
</compile_context>

<pallas_src>
import functools

import jax
import jax.numpy as jnp
import numpy as np
from jax.experimental import pallas as pl
from jax.experimental.pallas import tpu as pltpu

EPS = 1e-5
EXPANSION = 4
LANE = 128          # channel dims padded to a multiple of this (lane-dense stores)
TILE_M_MAX = 1024   # rows (N*H*W) per grid step (v5e/v6e benefit from large tiles)


def _round_up(x, m):
    return (x + m - 1) // m * m


def _vmem_limit_bytes():
    # v7x has only 64 MiB VMEM per TensorCore -> stay at 48 MiB unless HW reports more.
    try:
        cap = int(pltpu.get_tpu_info().vmem_capacity_bytes)
        if cap > 0:
            return int(min(max(cap * 3 // 4, 32 * 1024 * 1024), 96 * 1024 * 1024))
    except Exception:
        pass
    return 48 * 1024 * 1024


VMEM_LIMIT = _vmem_limit_bytes()
VMEM_BUDGET = max(VMEM_LIMIT - 8 * 1024 * 1024, 16 * 1024 * 1024)


def _choose_tile_m(m, row_bytes, resident_bytes=0):
    """Largest M tile fitting the VMEM budget (double-buffered), and >= 2 grid steps."""
    avail = max(VMEM_BUDGET - resident_bytes, 2 * 1024 * 1024)
    tile = avail // (2 * row_bytes)                 # M-tiles are double-buffered
    tile = min(TILE_M_MAX, max(8, (tile // 8) * 8))
    if m > 8:
        # at least two grid steps so dimension_semantics=("parallel",) can use both
        # v7x TensorCores even for small M.
        tile = min(tile, _round_up((m + 1) // 2, 8))
    return int(tile)


def _pad_rows(a, rows):
    return jnp.pad(a, ((0, rows - a.shape[0]), (0, 0)))


def _mosaic_params():
    return pltpu.CompilerParams(dimension_semantics=("parallel",),
                                vmem_limit_bytes=VMEM_LIMIT)


# --------------------------------------------------------------------------
# Pallas kernels
# --------------------------------------------------------------------------
def _write_stats(st_ref, y):
    # per-tile column sum and sum-of-squares (f32) for the BN finalize pass
    s1 = jnp.sum(y, axis=0, keepdims=True)
    s2 = jnp.sum(y * y, axis=0, keepdims=True)
    row = jax.lax.broadcasted_iota(jnp.int32, (8, y.shape[1]), 0)
    st_ref[...] = jnp.where(row == 0, s1, jnp.where(row == 1, s2, 0.0))


def matmul_stats_kernel(x_ref, w_ref, y_ref, st_ref):
    # bf16 x bf16 -> f32 accumulation on the MXU; output stored bf16, stats stay f32.
    y = jnp.dot(x_ref[...], w_ref[...], preferred_element_type=jnp.float32)
    y_ref[...] = y.astype(y_ref.dtype)
    _write_stats(st_ref, y)


def bn_act_kernel(y_ref, a_ref, b_ref, o_ref):
    y = y_ref[...].astype(jnp.float32) * a_ref[...] + b_ref[...]
    o_ref[...] = jnp.maximum(y, 0.0).astype(o_ref.dtype)


def conv3x3_stats_kernel(x_ref, w_ref, y_ref, st_ref, acc_ref, *, stride, ho, wo):
    # x_ref: (s*s, Hh, Wh, Cin) phase-split, spatially zero-padded activations (bf16)
    # w_ref: (9, Cin, Cout) bf16 (resident); acc_ref: (Ho*Wo, Cout) f32 VMEM scratch.
    # 9 shifted-window matmuls accumulated in VMEM -> no 9x im2col HBM traffic.
    s = stride
    cin = x_ref.shape[-1]
    for kh in range(3):
        for kw in range(3):
            ph = (kh % s) * s + (kw % s)
            r0, c0 = kh // s, kw // s
            win = x_ref[ph, r0:r0 + ho, c0:c0 + wo, :]            # (ho, wo, cin)
            tap = jnp.dot(win.reshape(ho * wo, cin), w_ref[kh * 3 + kw],
                          preferred_element_type=jnp.float32)
            if kh == 0 and kw == 0:
                acc_ref[...] = tap
            else:
                acc_ref[...] += tap
    y = acc_ref[...]
    y_ref[...] = y.astype(y_ref.dtype)
    _write_stats(st_ref, y)


def _bn_relu_masked_bf16(y_ref, a_ref, b_ref, tile_m, m_true):
    # Fused BN affine + ReLU on the matmul input (VPU work hidden under the MXU);
    # rows >= m_true (row padding) are forced to zero so downstream stats stay exact.
    y = y_ref[...].astype(jnp.float32) * a_ref[...] + b_ref[...]
    y = jnp.maximum(y, 0.0)
    row = jax.lax.broadcasted_iota(jnp.int32, y.shape, 0) + pl.program_id(0) * tile_m
    y = jnp.where(row < m_true, y, 0.0)
    return y.astype(jnp.bfloat16)


def fused_matmul_stats_kernel(y2_ref, a_ref, b_ref, w_ref, y_ref, st_ref, *,
                              tile_m, m_true):
    x = _bn_relu_masked_bf16(y2_ref, a_ref, b_ref, tile_m, m_true)
    y = jnp.dot(x, w_ref[...], preferred_element_type=jnp.float32)
    y_ref[...] = y.astype(y_ref.dtype)
    _write_stats(st_ref, y)


def fused_matmul2_stats_kernel(y2_ref, a_ref, b_ref, xs_ref, w_ref, ws_ref,
                               y_ref, ysc_ref, st_ref, stsc_ref, *, tile_m, m_true):
    # stage-3 1x1 conv (with fused BN2 affine+ReLU input) and downsample-shortcut 1x1 conv
    x = _bn_relu_masked_bf16(y2_ref, a_ref, b_ref, tile_m, m_true)
    y = jnp.dot(x, w_ref[...], preferred_element_type=jnp.float32)
    y_ref[...] = y.astype(y_ref.dtype)
    _write_stats(st_ref, y)
    ysc = jnp.dot(xs_ref[...], ws_ref[...], preferred_element_type=jnp.float32)
    ysc_ref[...] = ysc.astype(ysc_ref.dtype)
    _write_stats(stsc_ref, ysc)


def bn_add_relu_kernel(y_ref, sc_ref, a_ref, b_ref, asc_ref, bsc_ref,
                       out_ref, *pre_refs):
    pre = (y_ref[...].astype(jnp.float32) * a_ref[...] + b_ref[...]
           + sc_ref[...].astype(jnp.float32) * asc_ref[...] + bsc_ref[...])
    out_ref[...] = jnp.maximum(pre, 0.0).astype(out_ref.dtype)
    if pre_refs:                                      # pre-activation only when is_last
        pre_refs[0][...] = pre.astype(pre_refs[0].dtype)


# --------------------------------------------------------------------------
# pallas_call wrappers (grid tiled over M; weights / per-channel vectors resident)
# --------------------------------------------------------------------------
def matmul_stats(x2d, w2d, *, tile_m):
    m_pad, k = x2d.shape
    c = w2d.shape[1]
    nt = m_pad // tile_m
    y, st = pl.pallas_call(
        matmul_stats_kernel,
        grid=(nt,),
        in_specs=[pl.BlockSpec((tile_m, k), lambda i: (i, 0)),
                  pl.BlockSpec((k, c), lambda i: (0, 0))],
        out_specs=[pl.BlockSpec((tile_m, c), lambda i: (i, 0)),
                   pl.BlockSpec((8, c), lambda i: (i, 0))],
        out_shape=[jax.ShapeDtypeStruct((m_pad, c), jnp.bfloat16),
                   jax.ShapeDtypeStruct((nt * 8, c), jnp.float32)],
        compiler_params=_mosaic_params(),
        cost_estimate=pl.CostEstimate(
            flops=2 * m_pad * k * c + 3 * m_pad * c, transcendentals=0,
            bytes_accessed=m_pad * k * 2 + k * c * 2 + m_pad * c * 2 + nt * 8 * c * 4),
    )(x2d, w2d)
    st = st.reshape(nt, 8, c)
    return y, jnp.sum(st[:, 0, :], axis=0), jnp.sum(st[:, 1, :], axis=0)


def bn_act(y, scale, shift, *, tile_m):
    m_pad, c = y.shape
    nt = m_pad // tile_m
    return pl.pallas_call(
        bn_act_kernel,
        grid=(nt,),
        in_specs=[pl.BlockSpec((tile_m, c), lambda i: (i, 0)),
                  pl.BlockSpec((1, c), lambda i: (0, 0)),
                  pl.BlockSpec((1, c), lambda i: (0, 0))],
        out_specs=pl.BlockSpec((tile_m, c), lambda i: (i, 0)),
        out_shape=jax.ShapeDtypeStruct((m_pad, c), jnp.bfloat16),
        compiler_params=_mosaic_params(),
    )(y, scale, shift)


def conv3x3_stats(xph, w2, *, stride, ho, wo):
    n, nph, hh, wh, cin = xph.shape
    cout = w2.shape[2]
    mrow = ho * wo
    kern = functools.partial(conv3x3_stats_kernel, stride=stride, ho=ho, wo=wo)
    y, st = pl.pallas_call(
        kern,
        grid=(n,),
        in_specs=[pl.BlockSpec((None, nph, hh, wh, cin), lambda i: (i, 0, 0, 0, 0)),
                  pl.BlockSpec((9, cin, cout), lambda i: (0, 0, 0))],
        out_specs=[pl.BlockSpec((None, mrow, cout), lambda i: (i, 0, 0)),
                   pl.BlockSpec((None, 8, cout), lambda i: (i, 0, 0))],
        out_shape=[jax.ShapeDtypeStruct((n, mrow, cout), jnp.bfloat16),
                   jax.ShapeDtypeStruct((n, 8, cout), jnp.float32)],
        scratch_shapes=[pltpu.VMEM((mrow, cout), jnp.float32)],
        compiler_params=_mosaic_params(),
        cost_estimate=pl.CostEstimate(
            flops=2 * n * mrow * 9 * cin * cout + 3 * n * mrow * cout,
            transcendentals=0,
            bytes_accessed=(n * (nph * hh * wh * cin * 2 + mrow * cout * 2 + 8 * cout * 4)
                            + 9 * cin * cout * 2)),
    )(xph, w2)
    return (y.reshape(n * mrow, cout),
            jnp.sum(st[:, 0, :], axis=0), jnp.sum(st[:, 1, :], axis=0))


def fused_matmul_stats(y2, a2, b2, w2d, *, tile_m, m_true):
    m_pad, k = y2.shape
    c = w2d.shape[1]
    nt = m_pad // tile_m
    kern = functools.partial(fused_matmul_stats_kernel, tile_m=tile_m, m_true=m_true)
    y, st = pl.pallas_call(
        kern,
        grid=(nt,),
        in_specs=[pl.BlockSpec((tile_m, k), lambda i: (i, 0)),
                  pl.BlockSpec((1, k), lambda i: (0, 0)),
                  pl.BlockSpec((1, k), lambda i: (0, 0)),
                  pl.BlockSpec((k, c), lambda i: (0, 0))],
        out_specs=[pl.BlockSpec((tile_m, c), lambda i: (i, 0)),
                   pl.BlockSpec((8, c), lambda i: (i, 0))],
        out_shape=[jax.ShapeDtypeStruct((m_pad, c), jnp.bfloat16),
                   jax.ShapeDtypeStruct((nt * 8, c), jnp.float32)],
        compiler_params=_mosaic_params(),
        cost_estimate=pl.CostEstimate(
            flops=2 * m_pad * k * c + 6 * m_pad * k + 3 * m_pad * c, transcendentals=0,
            bytes_accessed=m_pad * k * 2 + k * c * 2 + m_pad * c * 2 + nt * 8 * c * 4),
    )(y2, a2, b2, w2d)
    st = st.reshape(nt, 8, c)
    return y, jnp.sum(st[:, 0, :], axis=0), jnp.sum(st[:, 1, :], axis=0)


def fused_matmul2_stats(y2, a2, b2, xs, w3, ws, *, tile_m, m_true):
    m_pad, k1 = y2.shape
    k2 = xs.shape[1]
    c = w3.shape[1]
    nt = m_pad // tile_m
    kern = functools.partial(fused_matmul2_stats_kernel, tile_m=tile_m, m_true=m_true)
    y, ysc, st, stsc = pl.pallas_call(
        kern,
        grid=(nt,),
        in_specs=[pl.BlockSpec((tile_m, k1), lambda i: (i, 0)),
                  pl.BlockSpec((1, k1), lambda i: (0, 0)),
                  pl.BlockSpec((1, k1), lambda i: (0, 0)),
                  pl.BlockSpec((tile_m, k2), lambda i: (i, 0)),
                  pl.BlockSpec((k1, c), lambda i: (0, 0)),
                  pl.BlockSpec((k2, c), lambda i: (0, 0))],
        out_specs=[pl.BlockSpec((tile_m, c), lambda i: (i, 0)),
                   pl.BlockSpec((tile_m, c), lambda i: (i, 0)),
                   pl.BlockSpec((8, c), lambda i: (i, 0)),
                   pl.BlockSpec((8, c), lambda i: (i, 0))],
        out_shape=[jax.ShapeDtypeStruct((m_pad, c), jnp.bfloat16),
                   jax.ShapeDtypeStruct((m_pad, c), jnp.bfloat16),
                   jax.ShapeDtypeStruct((nt * 8, c), jnp.float32),
                   jax.ShapeDtypeStruct((nt * 8, c), jnp.float32)],
        compiler_params=_mosaic_params(),
        cost_estimate=pl.CostEstimate(
            flops=2 * m_pad * (k1 + k2) * c + 6 * m_pad * k1 + 6 * m_pad * c,
            transcendentals=0,
            bytes_accessed=(m_pad * (k1 + k2) * 2 + (k1 + k2) * c * 2
                            + 2 * m_pad * c * 2 + 2 * nt * 8 * c * 4)),
    )(y2, a2, b2, xs, w3, ws)
    st = st.reshape(nt, 8, c)
    stsc = stsc.reshape(nt, 8, c)
    return (y, ysc,
            jnp.sum(st[:, 0, :], axis=0), jnp.sum(st[:, 1, :], axis=0),
            jnp.sum(stsc[:, 0, :], axis=0), jnp.sum(stsc[:, 1, :], axis=0))


def bn_add_relu(y, sc, a, b, asc, bsc, *, tile_m, with_pre):
    m_pad, c = y.shape
    nt = m_pad // tile_m
    tile = pl.BlockSpec((tile_m, c), lambda i: (i, 0))
    vec = pl.BlockSpec((1, c), lambda i: (0, 0))
    out_shape = [jax.ShapeDtypeStruct((m_pad, c), jnp.float32)]
    out_specs = [tile]
    if with_pre:
        out_shape.append(jax.ShapeDtypeStruct((m_pad, c), jnp.float32))
        out_specs.append(tile)
    res = pl.pallas_call(
        bn_add_relu_kernel,
        grid=(nt,),
        in_specs=[tile, tile, vec, vec, vec, vec],
        out_specs=out_specs,
        out_shape=out_shape,
        compiler_params=_mosaic_params(),
    )(y, sc, a, b, asc, bsc)
    return res if with_pre else res[0]


def bn_scale_shift(s1, s2, gamma, beta, m_true):
    # BN finalize (tiny, XLA side): biased batch variance over the true M rows.
    mean = s1 / m_true
    var = jnp.maximum(s2 / m_true - mean * mean, 0.0)
    scale = gamma * jax.lax.rsqrt(var + EPS)
    shift = beta - mean * scale
    return scale.reshape(1, -1), shift.reshape(1, -1)


# --------------------------------------------------------------------------
# Glue: layout, stride-phase split, padded parameters
# --------------------------------------------------------------------------
def make_phases(o1, stride, ho, wo):
    # Zero-pad (conv padding=1) and split into stride x stride phases so the conv
    # kernel only needs CONTIGUOUS window slices per tap (same byte count as o1).
    n, h, w, c = o1.shape
    s = stride
    hh = ho + 2 // s
    wh = wo + 2 // s
    xp = jnp.pad(o1, ((0, 0), (1, s * hh - h - 1), (1, s * wh - w - 1), (0, 0)))
    xp = xp.reshape(n, hh, s, wh, s, c)
    return jnp.transpose(xp, (0, 2, 4, 1, 3, 5)).reshape(n, s * s, hh, wh, c)


def init_params(key, in_planes, planes):
    ks = jax.random.split(key, 12)
    cout = EXPANSION * planes

    def conv_w(k, co, ci, kh, kw):
        return 0.1 * jax.random.normal(k, (co, ci, kh, kw), jnp.float32)

    raw = {
        "w1": conv_w(ks[0], planes, in_planes, 1, 1),
        "w2": conv_w(ks[1], planes, planes, 3, 3),
        "w3": conv_w(ks[2], cout, planes, 1, 1),
        "ws": conv_w(ks[3], cout, in_planes, 1, 1),
        "g1": 1.0 + 0.1 * jax.random.normal(ks[4], (planes,), jnp.float32),
        "b1": 0.1 * jax.random.normal(ks[5], (planes,), jnp.float32),
        "g2": 1.0 + 0.1 * jax.random.normal(ks[6], (planes,), jnp.float32),
        "b2": 0.1 * jax.random.normal(ks[7], (planes,), jnp.float32),
        "g3": 1.0 + 0.1 * jax.random.normal(ks[8], (cout,), jnp.float32),
        "b3": 0.1 * jax.random.normal(ks[9], (cout,), jnp.float32),
        "gs": 1.0 + 0.1 * jax.random.normal(ks[10], (cout,), jnp.float32),
        "bs": 0.1 * jax.random.normal(ks[11], (cout,), jnp.float32),
    }

    cin_p = _round_up(in_planes, LANE)
    p_p = _round_up(planes, LANE)
    co_p = _round_up(cout, LANE)

    def pad_vec(v, n):
        return jnp.pad(v, (0, n - v.shape[0]))   # padded channels: gamma/beta = 0 -> output 0

    w1 = jnp.zeros((cin_p, p_p), jnp.float32).at[:in_planes, :planes].set(
        jnp.transpose(raw["w1"][:, :, 0, 0]))
    w2_hwio = jnp.transpose(raw["w2"], (2, 3, 1, 0))          # (3,3,cin,cout)
    w2 = jnp.zeros((3, 3, p_p, p_p), jnp.float32).at[:, :, :planes, :planes].set(w2_hwio)
    w2 = w2.reshape(9, p_p, p_p)                              # tap index = kh*3 + kw
    w3 = jnp.zeros((p_p, co_p), jnp.float32).at[:planes, :cout].set(
        jnp.transpose(raw["w3"][:, :, 0, 0]))
    ws = jnp.zeros((cin_p, co_p), jnp.float32).at[:in_planes, :cout].set(
        jnp.transpose(raw["ws"][:, :, 0, 0]))

    params = {
        "in_planes": in_planes, "planes": planes,
        "w1": w1.astype(jnp.bfloat16), "w2": w2.astype(jnp.bfloat16),
        "w3": w3.astype(jnp.bfloat16), "ws": ws.astype(jnp.bfloat16),
        "g1": pad_vec(raw["g1"], p_p), "b1": pad_vec(raw["b1"], p_p),
        "g2": pad_vec(raw["g2"], p_p), "b2": pad_vec(raw["b2"], p_p),
        "g3": pad_vec(raw["g3"], co_p), "b3": pad_vec(raw["b3"], co_p),
        "gs": pad_vec(raw["gs"], co_p), "bs": pad_vec(raw["bs"], co_p),
    }
    return params, raw


def bottleneck_forward(x_nchw, params, stride, is_last=False):
    in_planes, planes = params["in_planes"], params["planes"]
    cout = EXPANSION * planes
    cin_p = _round_up(in_planes, LANE)
    p_p = _round_up(planes, LANE)
    co_p = _round_up(cout, LANE)

    x = jnp.transpose(x_nchw, (0, 2, 3, 1))                                  # NHWC
    n, h, w, _ = x.shape
    xpch = jnp.pad(x, ((0, 0), (0, 0), (0, 0), (0, cin_p - in_planes))).astype(jnp.bfloat16)

    # ---------------- stage 1: 1x1 conv -> BN (batch stats) -> ReLU ----------------
    m1 = n * h * w
    tm1 = _choose_tile_m(m1, row_bytes=2 * (cin_p + 2 * p_p),
                         resident_bytes=4 * cin_p * p_p)
    m1p = _round_up(m1, tm1)
    x2d = _pad_rows(xpch.reshape(m1, cin_p), m1p)
    y1, s1, q1 = matmul_stats(x2d, params["w1"], tile_m=tm1)
    a1, b1 = bn_scale_shift(s1, q1, params["g1"], params["b1"], m1)
    o1 = bn_act(y1, a1, b1, tile_m=tm1)[:m1].reshape(n, h, w, p_p)           # bf16

    # ---------------- stage 2: in-kernel 3x3 conv (stride, pad=1) + stats ----------
    ho = (h - 1) // stride + 1
    wo = (w - 1) // stride + 1
    xph = make_phases(o1, stride, ho, wo)
    y2, s2, q2 = conv3x3_stats(xph, params["w2"], stride=stride, ho=ho, wo=wo)
    m2 = n * ho * wo
    a2, b2 = bn_scale_shift(s2, q2, params["g2"], params["b2"], m2)

    # ---------------- stage 3 (+ shortcut): BN2 affine+ReLU fused into matmul ------
    downsample = (stride != 1) or (in_planes != cout)
    row3 = 2 * (p_p + (cin_p if downsample else 0) + 2 * co_p)
    row_e = (2 + 2 + 4 + (4 if is_last else 0)) * co_p
    resident3 = 4 * (p_p + (cin_p if downsample else 0)) * co_p
    tm3 = _choose_tile_m(m2, row_bytes=max(row3, row_e), resident_bytes=resident3)
    m2p = _round_up(m2, tm3)
    y2p = _pad_rows(y2, m2p)

    if downsample:
        xs = _pad_rows(xpch[:, ::stride, ::stride, :].reshape(m2, cin_p), m2p)
        y3, ysc, s3, q3, ss, qs = fused_matmul2_stats(
            y2p, a2, b2, xs, params["w3"], params["ws"], tile_m=tm3, m_true=m2)
        a3, b3 = bn_scale_shift(s3, q3, params["g3"], params["b3"], m2)
        asc, bsc = bn_scale_shift(ss, qs, params["gs"], params["bs"], m2)
        sc = ysc
    else:
        y3, s3, q3 = fused_matmul_stats(y2p, a2, b2, params["w3"],
                                        tile_m=tm3, m_true=m2)
        a3, b3 = bn_scale_shift(s3, q3, params["g3"], params["b3"], m2)
        sc = _pad_rows(xpch.reshape(m1, cin_p), m2p)          # identity shortcut (bf16)
        asc = jnp.ones((1, co_p), jnp.float32)
        bsc = jnp.zeros((1, co_p), jnp.float32)

    outs = bn_add_relu(y3, sc, a3, b3, asc, bsc, tile_m=tm3, with_pre=is_last)

    if is_last:
        out2d, pre2d = outs
    else:
        out2d = outs
    out = jnp.transpose(out2d[:m2, :cout].reshape(n, ho, wo, cout), (0, 3, 1, 2))
    if is_last:
        pre = jnp.transpose(pre2d[:m2, :cout].reshape(n, ho, wo, cout), (0, 3, 1, 2))
        return out, pre
    return out


# --------------------------------------------------------------------------
# Pure-JAX reference (NCHW, training-mode BN) for correctness checks
# --------------------------------------------------------------------------
def ref_forward(x, raw, in_planes, planes, stride):
    def conv(a, w, s, pad):
        return jax.lax.conv_general_dilated(
            a, w, (s, s), pad, dimension_numbers=("NCHW", "OIHW", "NCHW"))

    def bn(a, g, b):
        mean = jnp.mean(a, axis=(0, 2, 3), keepdims=True)
        var = jnp.mean((a - mean) ** 2, axis=(0, 2, 3), keepdims=True)
        return ((a - mean) * jax.lax.rsqrt(var + EPS) * g.reshape(1, -1, 1, 1)
                + b.reshape(1, -1, 1, 1))

    out = jax.nn.relu(bn(conv(x, raw["w1"], 1, "VALID"), raw["g1"], raw["b1"]))
    out = jax.nn.relu(bn(conv(out, raw["w2"], stride, ((1, 1), (1, 1))), raw["g2"], raw["b2"]))
    out = bn(conv(out, raw["w3"], 1, "VALID"), raw["g3"], raw["b3"])
    if stride != 1 or in_planes != EXPANSION * planes:
        sc = bn(conv(x, raw["ws"], stride, "VALID"), raw["gs"], raw["bs"])
    else:
        sc = x
    pre = out + sc
    return jax.nn.relu(pre), pre


if __name__ == "__main__":
    key = jax.random.PRNGKey(0)
    kx, kp, kx2, kp2 = jax.random.split(key, 4)

    # Config A: downsampling shortcut (stride=2, channel expansion), is_last=True
    in_planes, planes, stride = 4, 4, 2
    x = jax.random.normal(kx, (2, in_planes, 16, 16), jnp.float32)
    params, raw = init_params(kp, in_planes, planes)
    out, preact = bottleneck_forward(x, params, stride, is_last=True)
    out = jax.block_until_ready(out)
    preact = jax.block_until_ready(preact)
    ref_out, ref_pre = ref_forward(x, raw, in_planes, planes, stride)
    # bf16 intermediate storage -> slightly looser tolerance than a pure-f32 pipeline
    np.testing.assert_allclose(np.asarray(out), np.asarray(ref_out), atol=3e-2, rtol=3e-2)
    np.testing.assert_allclose(np.asarray(preact), np.asarray(ref_pre), atol=3e-2, rtol=3e-2)

    # Config B: identity shortcut (stride=1, in_planes == 4*planes), is_last=False
    in_planes2, planes2, stride2 = 16, 4, 1
    x2 = jax.random.normal(kx2, (2, in_planes2, 8, 8), jnp.float32)
    params2, raw2 = init_params(kp2, in_planes2, planes2)
    out2 = jax.block_until_ready(bottleneck_forward(x2, params2, stride2, is_last=False))
    ref_out2, _ = ref_forward(x2, raw2, in_planes2, planes2, stride2)
    np.testing.assert_allclose(np.asarray(out2), np.asarray(ref_out2), atol=3e-2, rtol=3e-2)

    print("KERNEL_OK")
</pallas_src>

<mosaic_0001>
module attributes {stable_mosaic.version = 11 : i64} {
  func.func @matmul_stats_kernel(%arg0: i32, %arg1: memref<256x128xbf16, #tpu.memory_space<vmem>>, %arg2: memref<128x128xbf16, #tpu.memory_space<vmem>>, %arg3: memref<256x128xbf16, #tpu.memory_space<vmem>>, %arg4: memref<8x128xf32, #tpu.memory_space<vmem>>) attributes {dimension_semantics = [#tpu.dimension_semantics<parallel>], iteration_bounds = array<i64: 2>, scalar_prefetch = 0 : i64, scratch_operands = 0 : i64, tpu.core_type = #tpu.core_type<tc>, window_params = [{transform_indices = @transform_0, window_bounds = array<i64: 256, 128>}, {pipeline_mode = #tpu.pipeline_mode<synchronous>, transform_indices = @transform_1, window_bounds = array<i64: 128, 128>}, {transform_indices = @transform_2, window_bounds = array<i64: 256, 128>}, {transform_indices = @transform_3, window_bounds = array<i64: 8, 128>}]} {
    %c0 = arith.constant 0 : index
    %c0_0 = arith.constant 0 : index
    %0 = vector.load %arg1[%c0, %c0_0] : memref<256x128xbf16, #tpu.memory_space<vmem>>, vector<256x128xbf16>
    %c0_1 = arith.constant 0 : index
    %c0_2 = arith.constant 0 : index
    %1 = vector.load %arg2[%c0_1, %c0_2] : memref<128x128xbf16, #tpu.memory_space<vmem>>, vector<128x128xbf16>
    %cst = arith.constant dense<0.000000e+00> : vector<256x128xf32>
    %2 = tpu.matmul %0, %1, %cst {dimension_numbers = #tpu.dot_dimension_numbers<[1], [0], [0], [1], [0, 0, 1, 1], [], []>} : vector<256x128xbf16>, vector<128x128xbf16>, vector<256x128xf32> -> vector<256x128xf32>
    %3 = arith.truncf %2 : vector<256x128xf32> to vector<256x128xbf16>
    %c0_3 = arith.constant 0 : index
    %c0_4 = arith.constant 0 : index
    %4 = vector.load %arg3[%c0_3, %c0_4] : memref<256x128xbf16, #tpu.memory_space<vmem>>, vector<256x128xbf16>
    tpu.vector_store %arg3[%c0_3, %c0_4], %3 {strides = array<i32>} : memref<256x128xbf16, #tpu.memory_space<vmem>>, vector<256x128xbf16>,
    %cst_5 = arith.constant dense<0.000000e+00> : vector<128xf32>
    %5 = vector.multi_reduction <add>, %2, %cst_5 [0] : vector<256x128xf32> to vector<128xf32>
    %6 = vector.shape_cast %5 : vector<128xf32> to vector<1x128xf32>
    %7 = arith.mulf %2, %2 : vector<256x128xf32>
    %cst_6 = arith.constant dense<0.000000e+00> : vector<128xf32>
    %8 = vector.multi_reduction <add>, %7, %cst_6 [0] : vector<256x128xf32> to vector<128xf32>
    %9 = vector.shape_cast %8 : vector<128xf32> to vector<1x128xf32>
    %10 = tpu.iota {dimensions = array<i32: 0>} : vector<8x128xi32>
    %c0_i32 = arith.constant 0 : i32
    %11 = vector.broadcast %c0_i32 : i32 to vector<8x128xi32>
    %12 = arith.cmpi eq, %10, %11 : vector<8x128xi32>
    %c1_i32 = arith.constant 1 : i32
    %13 = vector.broadcast %c1_i32 : i32 to vector<8x128xi32>
    %14 = arith.cmpi eq, %10, %13 : vector<8x128xi32>
    %cst_7 = arith.constant 0.000000e+00 : f32
    %15 = vector.shape_cast %9 : vector<1x128xf32> to vector<1x128xf32>
    %16 = vector.broadcast %15 : vector<1x128xf32> to vector<8x128xf32>
    %17 = vector.broadcast %cst_7 : f32 to vector<8x128xf32>
    %18 = arith.select %14, %16, %17 : vector<8x128xi1>, vector<8x128xf32>
    %19 = vector.shape_cast %6 : vector<1x128xf32> to vector<1x128xf32>
    %20 = vector.broadcast %19 : vector<1x128xf32> to vector<8x128xf32>
    %21 = arith.select %12, %20, %18 : vector<8x128xi1>, vector<8x128xf32>
    %c0_8 = arith.constant 0 : index
    %c0_9 = arith.constant 0 : index
    %22 = vector.load %arg4[%c0_8, %c0_9] : memref<8x128xf32, #tpu.memory_space<vmem>>, vector<8x128xf32>
    tpu.vector_store %arg4[%c0_8, %c0_9], %21 {strides = array<i32>} : memref<8x128xf32, #tpu.memory_space<vmem>>, vector<8x128xf32>,
    return
  }
  func.func @transform_0(%arg0: i32) -> (i32, i32) {
    %c0_i32 = arith.constant 0 : i32
    %c0_i32_0 = arith.constant 0 : i32
    return %arg0, %c0_i32 : i32, i32
  }
  func.func @transform_1(%arg0: i32) -> (i32, i32) {
    %c0_i32 = arith.constant 0 : i32
    %c0_i32_0 = arith.constant 0 : i32
    %c0_i32_1 = arith.constant 0 : i32
    return %c0_i32, %c0_i32_0 : i32, i32
  }
  func.func @transform_2(%arg0: i32) -> (i32, i32) {
    %c0_i32 = arith.constant 0 : i32
    %c0_i32_0 = arith.constant 0 : i32
    return %arg0, %c0_i32 : i32, i32
  }
  func.func @transform_3(%arg0: i32) -> (i32, i32) {
    %c0_i32 = arith.constant 0 : i32
    %c0_i32_0 = arith.constant 0 : i32
    return %arg0, %c0_i32 : i32, i32
  }
}

</mosaic_0001>

<llo_original>
// kernel: tpu_custom_call.1
$region0: #{tpu_custom_call.1}
  #allocation0 [shape = 'u32[]', space=smem, size = 0x4, offset = 0x4, fixed_abs, tag = 'smem constant byte address 0x4 - core index']
  #allocation1 [shape = 'u32[72,128]{1,0:T(1,128)}', space=vmem, size = 0x9000, scoped, tag = 'internal scratch']
  %s0 = inlined_call_operand.hbm [shape: bf16[512,128], index: 0, kind: input, shape index: {}]
  %s1 = inlined_call_operand.hbm [shape: bf16[128,128], index: 1, kind: input, shape index: {}]
  %s2 = inlined_call_operand.hbm [shape: bf16[512,128], index: 2, kind: output, shape index: {0}]
  %s3 = inlined_call_operand.hbm [shape: f32[16,128], index: 3, kind: output, shape index: {1}]
  %4 = xla_tuple %s2, %s3
  %s5 = sld [smem:[#allocation0]]
  $region57: #{tpu_custom_call.1} parent=0
    _
  %s7 = ssub.s32 1, %s5
  %s8 = scalar_select 0, %s7, %s5
  $region1: #{tpu_custom_call.1} parent=0
    #allocation2 [shape = 'u8[131072]{0}', space=vmem, size = 0x20000, scoped, tag = 'input window, operand 0']
    #allocation3 [shape = 's32[2]{0}', space=sflag, size = 0x8, scoped, tag = 'scoped memory for tpu_custom_call.1']
    #allocation4 [shape = 's32[2]{0}', space=sflag, size = 0x8, scoped, tag = 'scoped memory for tpu_custom_call.1']
    #allocation5 [shape = 'u8[32768]{0}', space=vmem, size = 0x8000, scoped, tag = 'input window, operand 1, single buffered']
    #allocation6 [shape = 's32[1]{0}', space=sflag, size = 0x4, scoped, tag = 'scoped memory for tpu_custom_call.1']
    #allocation7 [shape = 'u8[131072]{0}', space=vmem, size = 0x20000, scoped, tag = 'output window, operand 0']
    #allocation8 [shape = 'u8[8192]{0}', space=vmem, size = 0x2000, scoped, tag = 'output window, operand 1']
    #allocation9 [shape = 's32[2]{0}', space=sflag, size = 0x8, scoped, tag = 'scoped memory for tpu_custom_call.1']
    %9 = vsyncpa [#allocation3], 0
    %s10 = scalar_lea.sflag [#allocation3], 1
    %11 = vsyncpa %s10, 0
    %12 = vsyncpa [#allocation6], 0
    %13 = vsyncpa [#allocation4], 0
    %s14 = scalar_lea.sflag [#allocation4], 1
    %15 = vsyncpa %s14, 0
    %16 = vsyncpa [#allocation9], 0
    %s17 = scalar_lea.sflag [#allocation9], 1
    %18 = vsyncpa %s17, 0
    loop: start=0, step=1, limit=4
    $region2: #{tpu_custom_call.1} parent=1 // loop_pre_header
      _
    $region3: #{tpu_custom_call.1} parent=1 // loop_header
      %s20 = sphi 0, %s24
      %p21 = scmp.ge.s32.totalorder %s20, 4
      %s30 = sphi 0, %s32
      %s33 = sphi 0, %s30
      %s34 = sphi 0, %s33
      %s50 = sphi 0, %s34
      %s54 = sphi 0, %s54
      %s56 = sphi 0, %s54
      %s57 = sphi 0, %s56
      %s71 = sphi 0, %s57
      %s77 = sphi 0, %s79
      %s80 = sphi 0, %s77
      %s81 = sphi 0, %s80
      %s97 = sphi 0, %s81
      %s103 = sphi 0, %s105
      %s106 = sphi 0, %s103
      %s107 = sphi 0, %s106
      %s123 = sphi 0, %s107
    $region4: #{tpu_custom_call.1} parent=1 // loop_header_branch
      %23 = sbr.rel (%p21) target = $region8
    $region5: #{tpu_custom_call.1} parent=1 // loop_body
      %s25 = ssub.s32 %s20, 1
      %s26 = ssub.s32 %s20, 2
      %s27 = sadd.s32 %s20, 1
      %s28 = ssub.s32 %s20, %s27
      %p29 = scmp.eq.s32.totalorder %s28, 0
      %s31 = sadd.s32 %s30, 1
      %s32 = scalar_select %p29, %s30, %s31
      %p35 = pneg %p29
      %p36 = scmp.eq.s32.totalorder %s20, 1
      %p37 = por %p35, %p36
      %p38 = scmp.ne.s32.totalorder %s30, %s33
      %p39 = scmp.eq.s32.totalorder %s20, 0
      %p40 = por %p38, %p39
      %p41 = scmp.ne.s32.totalorder %s30, %s33
      %p42 = scmp.eq.s32.totalorder %s25, 1
      %p43 = por %p41, %p42
      %p44 = scmp.ne.s32.totalorder %s33, %s34
      %p45 = scmp.eq.s32.totalorder %s25, 0
      %p46 = por %p44, %p45
      %p47 = scmp.ne.s32.totalorder %s33, %s34
      %p48 = scmp.eq.s32.totalorder %s26, 1
      %p49 = por %p47, %p48
      %p51 = scmp.ne.s32.totalorder %s34, %s50
      %p52 = scmp.eq.s32.totalorder %s26, 0
      %p53 = por %p51, %p52
      %s55 = sadd.s32 %s54, 1
      %p58 = scmp.eq.s32.totalorder %s20, 1
      %p59 = scmp.ne.s32.totalorder %s54, %s56
      %p60 = scmp.eq.s32.totalorder %s20, 0
      %p61 = por %p59, %p60
      %p62 = scmp.ne.s32.totalorder %s54, %s56
      %p63 = scmp.eq.s32.totalorder %s25, 1
      %p64 = por %p62, %p63
      %p65 = scmp.ne.s32.totalorder %s56, %s57
      %p66 = scmp.eq.s32.totalorder %s25, 0
      %p67 = por %p65, %p66
      %p68 = scmp.ne.s32.totalorder %s56, %s57
      %p69 = scmp.eq.s32.totalorder %s26, 1
      %p70 = por %p68, %p69
      %p72 = scmp.ne.s32.totalorder %s57, %s71
      %p73 = scmp.eq.s32.totalorder %s26, 0
      %p74 = por %p72, %p73
      %s75 = ssub.s32 %s20, %s27
      %p76 = scmp.eq.s32.totalorder %s75, 0
      %s78 = sadd.s32 %s77, 1
      %s79 = scalar_select %p76, %s77, %s78
      %p82 = pneg %p76
      %p83 = scmp.eq.s32.totalorder %s20, 1
      %p84 = por %p82, %p83
      %p85 = scmp.ne.s32.totalorder %s77, %s80
      %p86 = scmp.eq.s32.totalorder %s20, 0
      %p87 = por %p85, %p86
      %p88 = scmp.ne.s32.totalorder %s77, %s80
      %p89 = scmp.eq.s32.totalorder %s25, 1
      %p90 = por %p88, %p89
      %p91 = scmp.ne.s32.totalorder %s80, %s81
      %p92 = scmp.eq.s32.totalorder %s25, 0
      %p93 = por %p91, %p92
      %p94 = scmp.ne.s32.totalorder %s80, %s81
      %p95 = scmp.eq.s32.totalorder %s26, 1
      %p96 = por %p94, %p95
      %p98 = scmp.ne.s32.totalorder %s81, %s97
      %p99 = scmp.eq.s32.totalorder %s26, 0
      %p100 = por %p98, %p99
      %s101 = ssub.s32 %s20, %s27
      %p102 = scmp.eq.s32.totalorder %s101, 0
      %s104 = sadd.s32 %s103, 1
      %s105 = scalar_select %p102, %s103, %s104
      %p108 = pneg %p102
      %p109 = scmp.eq.s32.totalorder %s20, 1
      %p110 = por %p108, %p109
      %p111 = scmp.ne.s32.totalorder %s103, %s106
      %p112 = scmp.eq.s32.totalorder %s20, 0
      %p113 = por %p111, %p112
      %p114 = scmp.ne.s32.totalorder %s103, %s106
      %p115 = scmp.eq.s32.totalorder %s25, 1
      %p116 = por %p114, %p115
      %p117 = scmp.ne.s32.totalorder %s106, %s107
      %p118 = scmp.eq.s32.totalorder %s25, 0
      %p119 = por %p117, %p118
      %p120 = scmp.ne.s32.totalorder %s106, %s107
      %p121 = scmp.eq.s32.totalorder %s26, 1
      %p122 = por %p120, %p121
      %p124 = scmp.ne.s32.totalorder %s107, %s123
      %p125 = scmp.eq.s32.totalorder %s26, 0
      %p126 = por %p124, %p125
      %p127 = scmp.le.s32.totalorder 1, %s20
      %p128 = scmp.lt.s32.totalorder %s20, 3
      %p129 = pnand %p127, %p128
      %p130 = pneg %p129
      // Predicated region
      $region9: #{tpu_custom_call.1} parent=5 // pred_check
        _
      $region10: #{tpu_custom_call.1} parent=5 // pred_check_branch
        %132 = sbr.rel (%p129) target = $region12
      $region11: #{tpu_custom_call.1} parent=5 // pred_region
        %s133 = ssub.s32 %s20, 1
        // Predicated region
        $region13: #{tpu_custom_call.1} parent=11 // pred_check
          %p134 = pneg %p67
        $region14: #{tpu_custom_call.1} parent=11 // pred_check_branch
          %136 = sbr.rel (%p134) target = $region16
        $region15: #{tpu_custom_call.1} parent=11 // pred_region
          %138 = vsyncadd [#allocation6], 0
          %s139 = sshll.u32 %s1, 4
          %s140 = int_to_ptr.hbm [resolvable:$true] %s139
          %s141 = sshll.u32 [#allocation5], 4
          %s142 = int_to_ptr.vmem [resolvable:$true] %s141
          %147 = dma.hbm_to_vmem [thread:$0]  %s140, 1024, %s142, [#allocation6], 64, 64, 4
        $region16: #{tpu_custom_call.1} parent=11 // pred_fallthru
          _
      $region12: #{tpu_custom_call.1} parent=5 // pred_fallthru
        _
      %p148 = scmp.lt.s32.totalorder %s20, 2
      // Predicated region
      $region17: #{tpu_custom_call.1} parent=5 // pred_check
        %p149 = pneg %p148
      $region18: #{tpu_custom_call.1} parent=5 // pred_check_branch
        %151 = sbr.rel (%p149) target = $region20
      $region19: #{tpu_custom_call.1} parent=5 // pred_region
        // Predicated region
        $region21: #{tpu_custom_call.1} parent=19 // pred_check
          %p152 = pneg %p40
        $region22: #{tpu_custom_call.1} parent=19 // pred_check_branch
          %154 = sbr.rel (%p152) target = $region24
        $region23: #{tpu_custom_call.1} parent=19 // pred_region
          %s155 = sand.u32 %s30, 1
          %s156 = scalar_lea.sflag [#allocation3], %s155
          %s157 = sand.u32 %s30, 1
          %s158 = smul.addr %s157, 128
          %s159 = scalar_lea.vmem [#allocation2], %s158
          %s160 = smul.u32 32, %s20
          %162 = vsyncadd %s156, 0
          %s163 = smul.addr %s160, 4
          %s164 = scalar_lea.hbm %s0, %s163
          %s165 = sshll.u32 %s164, 4
          %s166 = int_to_ptr.hbm [resolvable:$true] %s165
          %s167 = sshll.u32 %s159, 4
          %s168 = int_to_ptr.vmem [resolvable:$true] %s167
          %173 = dma.hbm_to_vmem [thread:$0]  %s166, 2048, %s168, %s156, 64, 64, 4
        $region24: #{tpu_custom_call.1} parent=19 // pred_fallthru
          _
      $region20: #{tpu_custom_call.1} parent=5 // pred_fallthru
        _
      %p174 = scmp.le.s32.totalorder 1, %s20
      %p175 = scmp.lt.s32.totalorder %s20, 3
      %p176 = pnand %p174, %p175
      %p177 = pneg %p176
      // Predicated region
      $region25: #{tpu_custom_call.1} parent=5 // pred_check
        _
      $region26: #{tpu_custom_call.1} parent=5 // pred_check_branch
        %179 = sbr.rel (%p176) target = $region28
      $region27: #{tpu_custom_call.1} parent=5 // pred_region
        %s180 = ssub.s32 %s20, 1
        %s181 = sand.u32 %s33, 1
        %s182 = scalar_lea.sflag [#allocation3], %s181
        %s183 = sand.u32 %s33, 1
        %s184 = smul.addr %s183, 128
        %s185 = scalar_lea.vmem [#allocation2], %s184
        // Predicated region
        $region29: #{tpu_custom_call.1} parent=27 // pred_check
          %p186 = pneg %p46
        $region30: #{tpu_custom_call.1} parent=27 // pred_check_branch
          %188 = sbr.rel (%p186) target = $region32
        $region31: #{tpu_custom_call.1} parent=27 // pred_region
          %190 = dma.done %s182, 2048
        $region32: #{tpu_custom_call.1} parent=27 // pred_fallthru
          _
        // Predicated region
        $region33: #{tpu_custom_call.1} parent=27 // pred_check
          %p191 = pneg %p67
        $region34: #{tpu_custom_call.1} parent=27 // pred_check_branch
          %193 = sbr.rel (%p191) target = $region36
        $region35: #{tpu_custom_call.1} parent=27 // pred_region
          %195 = dma.done [#allocation6], 1024
        $region36: #{tpu_custom_call.1} parent=27 // pred_fallthru
          _
        %s196 = sand.u32 %s33, 1
        %s197 = scalar_lea.sflag [#allocation3], %s196
        %s198 = sand.u32 %s33, 1
        %s199 = smul.addr %s198, 128
        %s200 = scalar_lea.vmem [#allocation2], %s199
        %p201 = pneg %p46
        %p202 = pneg %p43
        %p203 = pneg %p67
        %p204 = pneg %p64
        %p205 = pneg %p93
        %p206 = pneg %p90
        %s207 = sand.u32 %s80, 1
        %s208 = scalar_lea.sflag [#allocation4], %s207
        %s209 = sand.u32 %s80, 1
        %s210 = smul.addr %s209, 128
        %s211 = scalar_lea.vmem [#allocation7], %s210
        %p212 = pneg %p119
        %p213 = pneg %p116
        %s214 = sand.u32 %s106, 1
        %s215 = scalar_lea.sflag [#allocation9], %s214
        %s216 = sand.u32 %s106, 1
        %s217 = smul.addr %s216, 8
        %s218 = scalar_lea.vmem [#allocation8], %s217
        %s219 = smul.u32 32, %s25
        %s220 = smul.u32 32, %s25
        %v221 = vld [vmem:[%s185] sm:$0xf]
        %v222 = vld [vmem:[%s185 + $0x4] sm:$0xf]
        %v223 = vld [vmem:[%s185 + $0x8] sm:$0xf]
        %v224 = vld [vmem:[%s185 + $0xc] sm:$0xf]
        %v225 = vld [vmem:[%s185 + $0x10] sm:$0xf]
        %v226 = vld [vmem:[%s185 + $0x14] sm:$0xf]
        %v227 = vld [vmem:[%s185 + $0x18] sm:$0xf]
        %v228 = vld [vmem:[%s185 + $0x1c] sm:$0xf]
        %v229 = vld [vmem:[%s185 + $0x20] sm:$0xf]
        %v230 = vld [vmem:[%s185 + $0x24] sm:$0xf]
        %v231 = vld [vmem:[%s185 + $0x28] sm:$0xf]
        %v232 = vld [vmem:[%s185 + $0x2c] sm:$0xf]
        %v233 = vld [vmem:[%s185 + $0x30] sm:$0xf]
        %v234 = vld [vmem:[%s185 + $0x34] sm:$0xf]
        %v235 = vld [vmem:[%s185 + $0x38] sm:$0xf]
        %v236 = vld [vmem:[%s185 + $0x3c] sm:$0xf]
        %v237 = vld [vmem:[%s185 + $0x40] sm:$0xf]
        %v238 = vld [vmem:[%s185 + $0x44] sm:$0xf]
        %v239 = vld [vmem:[%s185 + $0x48] sm:$0xf]
        %v240 = vld [vmem:[%s185 + $0x4c] sm:$0xf]
        %v241 = vld [vmem:[%s185 + $0x50] sm:$0xf]
        %v242 = vld [vmem:[%s185 + $0x54] sm:$0xf]
        %v243 = vld [vmem:[%s185 + $0x58] sm:$0xf]
        %v244 = vld [vmem:[%s185 + $0x5c] sm:$0xf]
        %v245 = vld [vmem:[%s185 + $0x60] sm:$0xf]
        %v246 = vld [vmem:[%s185 + $0x64] sm:$0xf]
        %v247 = vld [vmem:[%s185 + $0x68] sm:$0xf]
        %v248 = vld [vmem:[%s185 + $0x6c] sm:$0xf]
        %v249 = vld [vmem:[%s185 + $0x70] sm:$0xf]
        %v250 = vld [vmem:[%s185 + $0x74] sm:$0xf]
        %v251 = vld [vmem:[%s185 + $0x78] sm:$0xf]
        %v252 = vld [vmem:[%s185 + $0x7c] sm:$0xf]
        %v253 = vld [vmem:[#allocation5] sm:$0xf]
        %v254 = vld [vmem:[#allocation5 + $0x4] sm:$0xf]
        %v255 = vld [vmem:[#allocation5 + $0x8] sm:$0xf]
        %v256 = vld [vmem:[#allocation5 + $0xc] sm:$0xf]
        %v257 = vld [vmem:[#allocation5 + $0x10] sm:$0xf]
        %v258 = vld [vmem:[#allocation5 + $0x14] sm:$0xf]
        %v259 = vld [vmem:[#allocation5 + $0x18] sm:$0xf]
        %v260 = vld [vmem:[#allocation5 + $0x1c] sm:$0xf]
        %v261 = vld [vmem:[#allocation5 + $0x20] sm:$0xf]
        %v262 = vld [vmem:[#allocation5 + $0x24] sm:$0xf]
        %v263 = vld [vmem:[#allocation5 + $0x28] sm:$0xf]
        %v264 = vld [vmem:[#allocation5 + $0x2c] sm:$0xf]
        %v265 = vld [vmem:[#allocation5 + $0x30] sm:$0xf]
        %v266 = vld [vmem:[#allocation5 + $0x34] sm:$0xf]
        %v267 = vld [vmem:[#allocation5 + $0x38] sm:$0xf]
        %v268 = vld [vmem:[#allocation5 + $0x3c] sm:$0xf]
        %v301 = vunpack.c.l.b16 %v221
        %v302 = vunpack.c.l.b16 %v222
        %v303 = vunpack.c.l.b16 %v223
        %v304 = vunpack.c.l.b16 %v224
        %v305 = vunpack.c.l.b16 %v225
        %v306 = vunpack.c.l.b16 %v226
        %v307 = vunpack.c.l.b16 %v227
        %v308 = vunpack.c.l.b16 %v228
        %v309 = vunpack.c.l.b16 %v229
        %v310 = vunpack.c.l.b16 %v230
        %v311 = vunpack.c.l.b16 %v231
        %v312 = vunpack.c.l.b16 %v232
        %v313 = vunpack.c.l.b16 %v233
        %v314 = vunpack.c.l.b16 %v234
        %v315 = vunpack.c.l.b16 %v235
        %v316 = vunpack.c.l.b16 %v236
        %v317 = vunpack.c.l.b16 %v237
        %v318 = vunpack.c.l.b16 %v238
        %v319 = vunpack.c.l.b16 %v239
        %v320 = vunpack.c.l.b16 %v240
        %v321 = vunpack.c.l.b16 %v241
        %v322 = vunpack.c.l.b16 %v242
        %v323 = vunpack.c.l.b16 %v243
        %v324 = vunpack.c.l.b16 %v244
        %v325 = vunpack.c.l.b16 %v245
        %v326 = vunpack.c.l.b16 %v246
        %v327 = vunpack.c.l.b16 %v247
        %v328 = vunpack.c.l.b16 %v248
        %v329 = vunpack.c.l.b16 %v249
        %v330 = vunpack.c.l.b16 %v250
        %v331 = vunpack.c.l.b16 %v251
        %v332 = vunpack.c.l.b16 %v252
        %v333 = vpack.c.b16 %v302, %v301
        %v334 = vpack.c.b16 %v304, %v303
        %v335 = vpack.c.b16 %v306, %v305
        %v336 = vpack.c.b16 %v308, %v307
        %v337 = vpack.c.b16 %v310, %v309
        %v338 = vpack.c.b16 %v312, %v311
        %v339 = vpack.c.b16 %v314, %v313
        %v340 = vpack.c.b16 %v316, %v315
        %v341 = vpack.c.b16 %v318, %v317
        %v342 = vpack.c.b16 %v320, %v319
        %v343 = vpack.c.b16 %v322, %v321
        %v344 = vpack.c.b16 %v324, %v323
        %v345 = vpack.c.b16 %v326, %v325
        %v346 = vpack.c.b16 %v328, %v327
        %v347 = vpack.c.b16 %v330, %v329
        %v348 = vpack.c.b16 %v332, %v331
        %v381 = vunpack.c.l.b16 %v253
        %v382 = vunpack.c.l.b16 %v254
        %v383 = vunpack.c.l.b16 %v255
        %v384 = vunpack.c.l.b16 %v256
        %v385 = vunpack.c.l.b16 %v257
        %v386 = vunpack.c.l.b16 %v258
        %v387 = vunpack.c.l.b16 %v259
        %v388 = vunpack.c.l.b16 %v260
        %v389 = vunpack.c.l.b16 %v261
        %v390 = vunpack.c.l.b16 %v262
        %v391 = vunpack.c.l.b16 %v263
        %v392 = vunpack.c.l.b16 %v264
        %v393 = vunpack.c.l.b16 %v265
        %v394 = vunpack.c.l.b16 %v266
        %v395 = vunpack.c.l.b16 %v267
        %v396 = vunpack.c.l.b16 %v268
        %v397 = vpack.c.b16 %v382, %v381
        %v398 = vpack.c.b16 %v384, %v383
        %v399 = vpack.c.b16 %v386, %v385
        %v400 = vpack.c.b16 %v388, %v387
        %v401 = vpack.c.b16 %v390, %v389
        %v402 = vpack.c.b16 %v392, %v391
        %v403 = vpack.c.b16 %v394, %v393
        %v404 = vpack.c.b16 %v396, %v395
        %413 = vmatpush.bf16.msra.mxu0 %v404
        %414 = vmatpush.bf16.msra.mxu0 %v403
        %415 = vmatpush.bf16.msra.mxu0 %v402
        %416 = vmatpush.bf16.msra.mxu0 %v401
        %417 = vmatpush.bf16.msra.mxu0 %v400
        %418 = vmatpush.bf16.msra.mxu0 %v399
        %419 = vmatpush.bf16.msra.mxu0 %v398
        %420 = vmatpush.bf16.msra.mxu0 %v397
        %421 = vmatmul.bf16.gmra.mxu0 %v333
        %v422 = vpop.f32.mrf.mxu0
        %v423 = vadd.f32 0.0, %v422
        %v424 = vpop.f32.mrf.mxu0
        %v425 = vadd.f32 0.0, %v424
        %426 = vmatmul.bf16.gmra.mxu0 %v334
        %v427 = vpop.f32.mrf.mxu0
        %v428 = vadd.f32 0.0, %v427
        %v429 = vpop.f32.mrf.mxu0
        %v430 = vadd.f32 0.0, %v429
        %431 = vmatmul.bf16.gmra.mxu0 %v335
        %v432 = vpop.f32.mrf.mxu0
        %v433 = vadd.f32 0.0, %v432
        %v434 = vpop.f32.mrf.mxu0
        %v435 = vadd.f32 0.0, %v434
        %436 = vmatmul.bf16.gmra.mxu0 %v336
        %v437 = vpop.f32.mrf.mxu0
        %v438 = vadd.f32 0.0, %v437
        %v439 = vpop.f32.mrf.mxu0
        %v440 = vadd.f32 0.0, %v439
        %441 = vmatmul.bf16.gmra.mxu0 %v337
        %v442 = vpop.f32.mrf.mxu0
        %v443 = vadd.f32 0.0, %v442
        %v444 = vpop.f32.mrf.mxu0
        %v445 = vadd.f32 0.0, %v444
        %446 = vmatmul.bf16.gmra.mxu0 %v338
        %v447 = vpop.f32.mrf.mxu0
        %v448 = vadd.f32 0.0, %v447
        %v449 = vpop.f32.mrf.mxu0
        %v450 = vadd.f32 0.0, %v449
        %451 = vmatmul.bf16.gmra.mxu0 %v339
        %v452 = vpop.f32.mrf.mxu0
        %v453 = vadd.f32 0.0, %v452
        %v454 = vpop.f32.mrf.mxu0
        %v455 = vadd.f32 0.0, %v454
        %456 = vmatmul.bf16.gmra.mxu0 %v340
        %v457 = vpop.f32.mrf.mxu0
        %v458 = vadd.f32 0.0, %v457
        %v459 = vpop.f32.mrf.mxu0
        %v460 = vadd.f32 0.0, %v459
        %461 = vmatmul.bf16.gmra.mxu0 %v341
        %v462 = vpop.f32.mrf.mxu0
        %v463 = vadd.f32 0.0, %v462
        %v464 = vpop.f32.mrf.mxu0
        %v465 = vadd.f32 0.0, %v464
        %466 = vmatmul.bf16.gmra.mxu0 %v342
        %v467 = vpop.f32.mrf.mxu0
        %v468 = vadd.f32 0.0, %v467
        %v469 = vpop.f32.mrf.mxu0
        %v470 = vadd.f32 0.0, %v469
        %471 = vmatmul.bf16.gmra.mxu0 %v343
        %v472 = vpop.f32.mrf.mxu0
        %v473 = vadd.f32 0.0, %v472
        %v474 = vpop.f32.mrf.mxu0
        %v475 = vadd.f32 0.0, %v474
        %476 = vmatmul.bf16.gmra.mxu0 %v344
        %v477 = vpop.f32.mrf.mxu0
        %v478 = vadd.f32 0.0, %v477
        %v479 = vpop.f32.mrf.mxu0
        %v480 = vadd.f32 0.0, %v479
        %481 = vmatmul.bf16.gmra.mxu0 %v345
        %v482 = vpop.f32.mrf.mxu0
        %v483 = vadd.f32 0.0, %v482
        %v484 = vpop.f32.mrf.mxu0
        %v485 = vadd.f32 0.0, %v484
        %486 = vmatmul.bf16.gmra.mxu0 %v346
        %v487 = vpop.f32.mrf.mxu0
        %v488 = vadd.f32 0.0, %v487
        %v489 = vpop.f32.mrf.mxu0
        %v490 = vadd.f32 0.0, %v489
        %491 = vmatmul.bf16.gmra.mxu0 %v347
        %v492 = vpop.f32.mrf.mxu0
        %v493 = vadd.f32 0.0, %v492
        %v494 = vpop.f32.mrf.mxu0
        %v495 = vadd.f32 0.0, %v494
        %496 = vmatmul.bf16.gmra.mxu0 %v348
        %v497 = vpop.f32.mrf.mxu0
        %v498 = vadd.f32 0.0, %v497
        %v499 = vpop.f32.mrf.mxu0
        %v500 = vadd.f32 0.0, %v499
        %501 = vdwg.mxu0
        %v502 = vpack.c.bf16 %v423, %v423
        %v503 = vpack.c.bf16 %v425, %v425
        %v504 = vpack.c.bf16 %v428, %v428
        %v505 = vpack.c.bf16 %v430, %v430
        %v506 = vpack.c.bf16 %v433, %v433
        %v507 = vpack.c.bf16 %v435, %v435
        %v508 = vpack.c.bf16 %v438, %v438
        %v509 = vpack.c.bf16 %v440, %v440
        %v510 = vpack.c.bf16 %v443, %v443
        %v511 = vpack.c.bf16 %v445, %v445
        %v512 = vpack.c.bf16 %v448, %v448
        %v513 = vpack.c.bf16 %v450, %v450
        %v514 = vpack.c.bf16 %v453, %v453
        %v515 = vpack.c.bf16 %v455, %v455
        %v516 = vpack.c.bf16 %v458, %v458
        %v517 = vpack.c.bf16 %v460, %v460
        %v518 = vpack.c.bf16 %v463, %v463
        %v519 = vpack.c.bf16 %v465, %v465
        %v520 = vpack.c.bf16 %v468, %v468
        %v521 = vpack.c.bf16 %v470, %v470
        %v522 = vpack.c.bf16 %v473, %v473
        %v523 = vpack.c.bf16 %v475, %v475
        %v524 = vpack.c.bf16 %v478, %v478
        %v525 = vpack.c.bf16 %v480, %v480
        %v526 = vpack.c.bf16 %v483, %v483
        %v527 = vpack.c.bf16 %v485, %v485
        %v528 = vpack.c.bf16 %v488, %v488
        %v529 = vpack.c.bf16 %v490, %v490
        %v530 = vpack.c.bf16 %v493, %v493
        %v531 = vpack.c.bf16 %v495, %v495
        %v532 = vpack.c.bf16 %v498, %v498
        %v533 = vpack.c.bf16 %v500, %v500
        %534 = vst [vmem:[%s211] sm:$0xf] %v502
        %535 = vst [vmem:[%s211 + $0x4] sm:$0xf] %v503
        %536 = vst [vmem:[%s211 + $0x8] sm:$0xf] %v504
        %537 = vst [vmem:[%s211 + $0xc] sm:$0xf] %v505
        %538 = vst [vmem:[%s211 + $0x10] sm:$0xf] %v506
        %539 = vst [vmem:[%s211 + $0x14] sm:$0xf] %v507
        %540 = vst [vmem:[%s211 + $0x18] sm:$0xf] %v508
        %541 = vst [vmem:[%s211 + $0x1c] sm:$0xf] %v509
        %542 = vst [vmem:[%s211 + $0x20] sm:$0xf] %v510
        %543 = vst [vmem:[%s211 + $0x24] sm:$0xf] %v511
        %544 = vst [vmem:[%s211 + $0x28] sm:$0xf] %v512
        %545 = vst [vmem:[%s211 + $0x2c] sm:$0xf] %v513
        %546 = vst [vmem:[%s211 + $0x30] sm:$0xf] %v514
        %547 = vst [vmem:[%s211 + $0x34] sm:$0xf] %v515
        %548 = vst [vmem:[%s211 + $0x38] sm:$0xf] %v516
        %549 = vst [vmem:[%s211 + $0x3c] sm:$0xf] %v517
        %550 = vst [vmem:[%s211 + $0x40] sm:$0xf] %v518
        %551 = vst [vmem:[%s211 + $0x44] sm:$0xf] %v519
        %552 = vst [vmem:[%s211 + $0x48] sm:$0xf] %v520
        %553 = vst [vmem:[%s211 + $0x4c] sm:$0xf] %v521
        %554 = vst [vmem:[%s211 + $0x50] sm:$0xf] %v522
        %555 = vst [vmem:[%s211 + $0x54] sm:$0xf] %v523
        %556 = vst [vmem:[%s211 + $0x58] sm:$0xf] %v524
        %557 = vst [vmem:[%s211 + $0x5c] sm:$0xf] %v525
        %558 = vst [vmem:[%s211 + $0x60] sm:$0xf] %v526
        %559 = vst [vmem:[%s211 + $0x64] sm:$0xf] %v527
        %560 = vst [vmem:[%s211 + $0x68] sm:$0xf] %v528
        %561 = vst [vmem:[%s211 + $0x6c] sm:$0xf] %v529
        %562 = vst [vmem:[%s211 + $0x70] sm:$0xf] %v530
        %563 = vst [vmem:[%s211 + $0x74] sm:$0xf] %v531
        %564 = vst [vmem:[%s211 + $0x78] sm:$0xf] %v532
        %565 = vst [vmem:[%s211 + $0x7c] sm:$0xf] %v533
        %v566 = vadd.f32 %v423, %v425
        %v567 = vadd.f32 %v566, %v428
        %v568 = vadd.f32 %v567, %v430
        %v569 = vadd.f32 %v568, %v433
        %v570 = vadd.f32 %v569, %v435
        %v571 = vadd.f32 %v570, %v438
        %v572 = vadd.f32 %v571, %v440
        %v573 = vadd.f32 %v572, %v443
        %v574 = vadd.f32 %v573, %v445
        %v575 = vadd.f32 %v574, %v448
        %v576 = vadd.f32 %v575, %v450
        %v577 = vadd.f32 %v576, %v453
        %v578 = vadd.f32 %v577, %v455
        %v579 = vadd.f32 %v578, %v458
        %v580 = vadd.f32 %v579, %v460
        %v581 = vadd.f32 %v580, %v463
        %v582 = vadd.f32 %v581, %v465
        %v583 = vadd.f32 %v582, %v468
        %v584 = vadd.f32 %v583, %v470
        %v585 = vadd.f32 %v584, %v473
        %v586 = vadd.f32 %v585, %v475
        %v587 = vadd.f32 %v586, %v478
        %v588 = vadd.f32 %v587, %v480
        %v589 = vadd.f32 %v588, %v483
        %v590 = vadd.f32 %v589, %v485
        %v591 = vadd.f32 %v590, %v488
        %v592 = vadd.f32 %v591, %v490
        %v593 = vadd.f32 %v592, %v493
        %v594 = vadd.f32 %v593, %v495
        %v595 = vadd.f32 %v594, %v498
        %v596 = vadd.f32 %v595, %v500
        %v597 = vrot.slane %v596, 4
        %v598 = vadd.f32 %v596, %v597
        %v599 = vrot.slane %v598, 2
        %v600 = vadd.f32 %v598, %v599
        %v601 = vrot.slane %v600, 1
        %v602 = vadd.f32 %v600, %v601
        %v603 = vmul.f32 %v423, %v423
        %v604 = vmul.f32 %v425, %v425
        %v605 = vmul.f32 %v428, %v428
        %v606 = vmul.f32 %v430, %v430
        %v607 = vmul.f32 %v433, %v433
        %v608 = vmul.f32 %v435, %v435
        %v609 = vmul.f32 %v438, %v438
        %v610 = vmul.f32 %v440, %v440
        %v611 = vmul.f32 %v443, %v443
        %v612 = vmul.f32 %v445, %v445
        %v613 = vmul.f32 %v448, %v448
        %v614 = vmul.f32 %v450, %v450
        %v615 = vmul.f32 %v453, %v453
        %v616 = vmul.f32 %v455, %v455
        %v617 = vmul.f32 %v458, %v458
        %v618 = vmul.f32 %v460, %v460
        %v619 = vmul.f32 %v463, %v463
        %v620 = vmul.f32 %v465, %v465
        %v621 = vmul.f32 %v468, %v468
        %v622 = vmul.f32 %v470, %v470
        %v623 = vmul.f32 %v473, %v473
        %v624 = vmul.f32 %v475, %v475
        %v625 = vmul.f32 %v478, %v478
        %v626 = vmul.f32 %v480, %v480
        %v627 = vmul.f32 %v483, %v483
        %v628 = vmul.f32 %v485, %v485
        %v629 = vmul.f32 %v488, %v488
        %v630 = vmul.f32 %v490, %v490
        %v631 = vmul.f32 %v493, %v493
        %v632 = vmul.f32 %v495, %v495
        %v633 = vmul.f32 %v498, %v498
        %v634 = vmul.f32 %v500, %v500
        %v635 = vadd.f32 %v603, %v604
        %v636 = vadd.f32 %v635, %v605
        %v637 = vadd.f32 %v636, %v606
        %v638 = vadd.f32 %v637, %v607
        %v639 = vadd.f32 %v638, %v608
        %v640 = vadd.f32 %v639, %v609
        %v641 = vadd.f32 %v640, %v610
        %v642 = vadd.f32 %v641, %v611
        %v643 = vadd.f32 %v642, %v612
        %v644 = vadd.f32 %v643, %v613
        %v645 = vadd.f32 %v644, %v614
        %v646 = vadd.f32 %v645, %v615
        %v647 = vadd.f32 %v646, %v616
        %v648 = vadd.f32 %v647, %v617
        %v649 = vadd.f32 %v648, %v618
        %v650 = vadd.f32 %v649, %v619
        %v651 = vadd.f32 %v650, %v620
        %v652 = vadd.f32 %v651, %v621
        %v653 = vadd.f32 %v652, %v622
        %v654 = vadd.f32 %v653, %v623
        %v655 = vadd.f32 %v654, %v624
        %v656 = vadd.f32 %v655, %v625
        %v657 = vadd.f32 %v656, %v626
        %v658 = vadd.f32 %v657, %v627
        %v659 = vadd.f32 %v658, %v628
        %v660 = vadd.f32 %v659, %v629
        %v661 = vadd.f32 %v660, %v630
        %v662 = vadd.f32 %v661, %v631
        %v663 = vadd.f32 %v662, %v632
        %v664 = vadd.f32 %v663, %v633
        %v665 = vadd.f32 %v664, %v634
        %v666 = vrot.slane %v665, 4
        %v667 = vadd.f32 %v665, %v666
        %v668 = vrot.slane %v667, 2
        %v669 = vadd.f32 %v667, %v668
        %v670 = vrot.slane %v669, 1
        %v671 = vadd.f32 %v669, %v670
        %v672 = vlaneseq
        %v673 = vshrl.u32 %v672, 7
        %vm674 = vcmp.eq.s32.totalorder %v673, 0
        %vm675 = vcmp.eq.s32.totalorder %v673, 1
        %v676 = vsel %vm675, %v671, 0.0
        %v677 = vsel %vm674, %v602, %v676
        %678 = vst [vmem:[%s218] sm:$0xff] %v677
        %s679 = sand.u32 %s80, 1
        %s680 = scalar_lea.sflag [#allocation4], %s679
        %s681 = sand.u32 %s80, 1
        %s682 = smul.addr %s681, 128
        %s683 = scalar_lea.vmem [#allocation7], %s682
        %s684 = sand.u32 %s106, 1
        %s685 = scalar_lea.sflag [#allocation9], %s684
        %s686 = sand.u32 %s106, 1
        %s687 = smul.addr %s686, 8
        %s688 = scalar_lea.vmem [#allocation8], %s687
        // Predicated region
        $region37: #{tpu_custom_call.1} parent=27 // pred_check
          %p689 = pneg %p90
        $region38: #{tpu_custom_call.1} parent=27 // pred_check_branch
          %691 = sbr.rel (%p689) target = $region40
        $region39: #{tpu_custom_call.1} parent=27 // pred_region
          %s692 = smul.u32 32, %s25
          %694 = vsyncadd %s680, 0
          %s695 = smul.addr %s692, 4
          %s696 = scalar_lea.hbm %s2, %s695
          %s697 = sshll.u32 %s683, 4
          %s698 = int_to_ptr.vmem [resolvable:$true] %s697
          %s699 = sshll.u32 %s696, 4
          %s700 = int_to_ptr.hbm [resolvable:$true] %s699
          %705 = dma.vmem_to_hbm [thread:$0]  %s698, 2048, %s700, %s680, 64, 64, 4
        $region40: #{tpu_custom_call.1} parent=27 // pred_fallthru
          _
        // Predicated region
        $region41: #{tpu_custom_call.1} parent=27 // pred_check
          %p706 = pneg %p116
        $region42: #{tpu_custom_call.1} parent=27 // pred_check_branch
          %708 = sbr.rel (%p706) target = $region44
        $region43: #{tpu_custom_call.1} parent=27 // pred_region
          %710 = vsyncadd %s685, 0
          %s711 = smul.addr %s25, 8
          %s712 = scalar_lea.hbm %s3, %s711
          %s714 = sshll.u32 %s688, 4
          %s715 = int_to_ptr.vmem [resolvable:$true] %s714
          %s716 = sshll.u32 %s712, 4
          %s717 = int_to_ptr.hbm [resolvable:$true] %s716
          %719 = dma.vmem_to_hbm [thread:$0]  %s715, 128, %s717, %s685
        $region44: #{tpu_custom_call.1} parent=27 // pred_fallthru
          _
      $region28: #{tpu_custom_call.1} parent=5 // pred_fallthru
        _
      %p720 = scmp.le.s32.totalorder 2, %s20
      // Predicated region
      $region45: #{tpu_custom_call.1} parent=5 // pred_check
        %p721 = pneg %p720
      $region46: #{tpu_custom_call.1} parent=5 // pred_check_branch
        %723 = sbr.rel (%p721) target = $region48
      $region47: #{tpu_custom_call.1} parent=5 // pred_region
        %s724 = ssub.s32 %s20, 2
        // Predicated region
        $region49: #{tpu_custom_call.1} parent=47 // pred_check
          %p725 = pneg %p96
        $region50: #{tpu_custom_call.1} parent=47 // pred_check_branch
          %727 = sbr.rel (%p725) target = $region52
        $region51: #{tpu_custom_call.1} parent=47 // pred_region
          %s728 = sand.u32 %s81, 1
          %s729 = scalar_lea.sflag [#allocation4], %s728
          %s730 = sand.u32 %s81, 1
          %s731 = smul.addr %s730, 128
          %s732 = scalar_lea.vmem [#allocation7], %s731
          %734 = dma.done %s729, 2048
        $region52: #{tpu_custom_call.1} parent=47 // pred_fallthru
          _
        // Predicated region
        $region53: #{tpu_custom_call.1} parent=47 // pred_check
          %p735 = pneg %p122
        $region54: #{tpu_custom_call.1} parent=47 // pred_check_branch
          %737 = sbr.rel (%p735) target = $region56
        $region55: #{tpu_custom_call.1} parent=47 // pred_region
          %s738 = sand.u32 %s107, 1
          %s739 = scalar_lea.sflag [#allocation9], %s738
          %s740 = sand.u32 %s107, 1
          %s741 = smul.addr %s740, 8
          %s742 = scalar_lea.vmem [#allocation8], %s741
          %744 = dma.done %s739, 128
        $region56: #{tpu_custom_call.1} parent=47 // pred_fallthru
          _
      $region48: #{tpu_custom_call.1} parent=5 // pred_fallthru
        _
    $region6: #{tpu_custom_call.1} parent=1 // loop_footer
      %s24 = sadd.s32 1, %s20
    $region7: #{tpu_custom_call.1} parent=1 // loop_footer_branch
      %19 = sbr.rel target = $region3
    $region8: #{tpu_custom_call.1} parent=1 // loop_exit
      _
    %745 = vsyncpa [#allocation3], 1
    %s746 = scalar_lea.sflag [#allocation3], 1
    %747 = vsyncpa %s746, 1
    %748 = vsyncpa [#allocation6], 1
    %749 = vsyncpa [#allocation4], 1
    %s750 = scalar_lea.sflag [#allocation4], 1
    %751 = vsyncpa %s750, 1
    %752 = vsyncpa [#allocation9], 1
    %s753 = scalar_lea.sflag [#allocation9], 1
    %754 = vsyncpa %s753, 1

</llo_original>
